<compile_context>
chip_gen: v7x
topology: tpu7x:2x2x1
jax: 0.10.0
libtpu: 0.0.40
codegen_flags: <defaults>
</compile_context>

<pallas_src>
import math

import jax
import jax.numpy as jnp
from jax.experimental import pallas as pl
from jax.experimental.pallas import tpu as pltpu

NEG_INF = -1e30  # f32 bias pad for unused logit lanes: exp(NEG_INF - max) == 0


def policy_net_kernel(x_ref, w1_ref, b1_ref, w2_ref, b2_ref, w3_ref, b3_ref,
                      o_ref):
    # Streamed observation tile; cast to the MXU operand dtype in-kernel
    # (VPU work hidden under the tile DMA, no extra wrapper pass over x).
    x = x_ref[...].astype(w1_ref.dtype)                         # (TB, obs_dim)

    # fc1 + relu (context contribution already folded into b1, f32).
    h1 = jnp.dot(x, w1_ref[...], preferred_element_type=jnp.float32)
    h1 = jnp.maximum(h1 + b1_ref[...], 0.0)                     # (TB, 128) f32

    # fc2 + relu (hidden2 zero-padded to 128 lanes -> lane-dense).
    h2 = jnp.dot(h1.astype(w2_ref.dtype), w2_ref[...],
                 preferred_element_type=jnp.float32)
    h2 = jnp.maximum(h2 + b2_ref[...], 0.0)                     # (TB, 128) f32

    # fc3, computed lane-dense at 128 wide (NEG_INF bias pad on unused lanes).
    logits = jnp.dot(h2.astype(w3_ref.dtype), w3_ref[...],
                     preferred_element_type=jnp.float32)
    logits = logits + b3_ref[...]                               # (TB, 128) f32

    # Softmax over features; padded lanes give exp(NEG_INF - m) == 0 exactly.
    # Exact divide: keeps row sums == 1 to f32 precision (kernel is HBM-bound,
    # the handful of extra cycles are free).
    m = jnp.max(logits, axis=1, keepdims=True)
    e = jnp.exp(logits - m)
    denom = jnp.sum(e, axis=1, keepdims=True)
    probs = e / denom

    # Store only the real action lanes; the narrow HBM write is ~20x smaller
    # than the padded 128-lane store and removes the wrapper slice.
    o_ref[...] = probs[:, :o_ref.shape[1]].astype(o_ref.dtype)


def _round_up(x, m):
    return ((x + m - 1) // m) * m


def policy_net_forward(x, context, params, *, block_batch=4096,
                       matmul_dtype=jnp.float32):
    """x: (B, obs_dim) f32, context: (ctx_len,) f32.

    params = (w1, b1, w2, b2, w3, b3); weights stored as (in, out)
    (transpose of torch.nn.Linear.weight), biases as (1, out).
    """
    w1, b1, w2, b2, w3, b3 = params
    B, obs_dim = x.shape
    ctx_len = context.shape[0]
    state_dim = obs_dim + ctx_len
    assert w1.shape[0] == state_dim
    hidden1 = w1.shape[1]
    hidden2 = w2.shape[1]
    action_dim = w3.shape[1]

    # Fold the constant context into the fc1 bias (computed once, in f32).
    eff_b1 = (context.reshape(1, -1).astype(jnp.float32)
              @ w1[obs_dim:, :].astype(jnp.float32) + b1)       # (1, 128)
    w1x = w1[:obs_dim, :]                                       # (obs_dim, 128)

    # Zero-pad hidden2 to 128 lanes: relu(0 + 0) == 0 contributes nothing.
    h2p = _round_up(hidden2, 128)
    w2p = jnp.zeros((hidden1, h2p), jnp.float32).at[:, :hidden2].set(w2)
    b2p = jnp.zeros((1, h2p), jnp.float32).at[:, :hidden2].set(b2)

    # Lane-dense fc3 compute: pad the logit dimension to a multiple of 128.
    out_pad = _round_up(max(action_dim, 128), 128)
    w3p = jnp.zeros((h2p, out_pad), jnp.float32).at[:hidden2, :action_dim].set(w3)
    b3p = jnp.full((1, out_pad), NEG_INF, jnp.float32).at[:, :action_dim].set(b3)

    # Batch tiling. bf16 operands pack 16 sublanes per vreg, f32 pack 8.
    sub = 16 if matmul_dtype == jnp.bfloat16 else 8
    tb = _round_up(min(int(block_batch), _round_up(B, sub)), sub)
    # If the whole batch would collapse into a single grid step, split it so
    # v7x's 2 TensorCores (dimension_semantics="parallel") both get work.
    if B > 2 * sub and tb >= B:
        tb = _round_up(pl.cdiv(B, 2), sub)
    num_tiles = pl.cdiv(B, tb)   # ragged final tile: Pallas masks OOB rows

    # Resident MXU operands (weights) optionally in bf16; biases stay f32.
    w1m = w1x.astype(matmul_dtype)
    w2m = w2p.astype(matmul_dtype)
    w3m = w3p.astype(matmul_dtype)

    resident = lambda i: (0, 0)   # weights / biases stay VMEM-resident
    out = pl.pallas_call(
        policy_net_kernel,
        out_shape=jax.ShapeDtypeStruct((B, action_dim), jnp.float32),
        grid=(num_tiles,),
        in_specs=[
            pl.BlockSpec((tb, obs_dim), lambda i: (i, 0)),      # x tile (streamed)
            pl.BlockSpec((obs_dim, hidden1), resident),         # W1[:obs_dim]
            pl.BlockSpec((1, hidden1), resident),               # eff b1 (ctx folded)
            pl.BlockSpec((hidden1, h2p), resident),             # W2 (lane-padded)
            pl.BlockSpec((1, h2p), resident),                   # b2 (lane-padded)
            pl.BlockSpec((h2p, out_pad), resident),             # W3 (lane-padded)
            pl.BlockSpec((1, out_pad), resident),               # b3 (lane-padded)
        ],
        out_specs=pl.BlockSpec((tb, action_dim), lambda i: (i, 0)),
        compiler_params=pltpu.CompilerParams(
            dimension_semantics=("parallel",),                  # megacore batch split
            vmem_limit_bytes=64 * 1024 * 1024),                 # tb<=4096 fits easily
    )(x, w1m, eff_b1, w2m, b2p, w3m, b3p)

    return out


def init_linear(key, in_dim, out_dim):
    """Deterministic init mimicking torch.nn.Linear defaults."""
    kw, kb = jax.random.split(key)
    bound = 1.0 / math.sqrt(in_dim)
    w = jax.random.uniform(kw, (in_dim, out_dim), jnp.float32, -bound, bound)
    b = jax.random.uniform(kb, (1, out_dim), jnp.float32, -bound, bound)
    return w, b


if __name__ == "__main__":
    batch = 8
    obs_dim = 24
    context_len = 8
    state_dim = obs_dim + context_len
    action_dim = 6

    key = jax.random.PRNGKey(0)
    k_x, k_c, k1, k2, k3, k_x2 = jax.random.split(key, 6)

    x = jax.random.normal(k_x, (batch, obs_dim), jnp.float32)
    context = jax.random.normal(k_c, (context_len,), jnp.float32)

    w1, b1 = init_linear(k1, state_dim, 128)
    w2, b2 = init_linear(k2, 128, 64)
    w3, b3 = init_linear(k3, 64, action_dim)
    params = (w1, b1, w2, b2, w3, b3)

    def reference(xi):
        ctx = jnp.broadcast_to(context.reshape(1, -1), (xi.shape[0], context_len))
        xc = jnp.concatenate([xi, ctx], axis=-1)
        h1 = jnp.maximum(xc @ w1 + b1, 0.0)
        h2 = jnp.maximum(h1 @ w2 + b2, 0.0)
        return jax.nn.softmax(h2 @ w3 + b3, axis=1)

    # --- f32 path (default large-tile config) ----------------------------------
    out = jax.block_until_ready(policy_net_forward(x, context, params))
    ref = reference(x)
    assert out.shape == (batch, action_dim)
    assert jnp.allclose(out, ref, atol=1e-3, rtol=1e-3)
    assert jnp.allclose(jnp.sum(out, axis=1), 1.0, atol=1e-4)

    # --- multi-tile grid with ragged batch (exercises OOB masking + pipelining)
    batch2 = 40
    x2 = jax.random.normal(k_x2, (batch2, obs_dim), jnp.float32)
    out2 = jax.block_until_ready(
        policy_net_forward(x2, context, params, block_batch=16))
    ref2 = reference(x2)
    assert out2.shape == (batch2, action_dim)
    assert jnp.allclose(out2, ref2, atol=1e-3, rtol=1e-3)
    assert jnp.allclose(jnp.sum(out2, axis=1), 1.0, atol=1e-4)

    # --- bf16 MXU-operand path (in-kernel cast; v6e/v7x DMA halving) -----------
    out_bf = jax.block_until_ready(
        policy_net_forward(x2, context, params, block_batch=16,
                           matmul_dtype=jnp.bfloat16))
    assert out_bf.shape == (batch2, action_dim)
    assert jnp.allclose(out_bf, ref2, atol=5e-2, rtol=5e-2)
    assert jnp.allclose(jnp.sum(out_bf, axis=1), 1.0, atol=1e-3)

    print("KERNEL_OK")
</pallas_src>

<mosaic_0001>
module attributes {stable_mosaic.version = 11 : i64} {
  func.func @policy_net_kernel(%arg0: i32, %arg1: memref<8x24xf32, #tpu.memory_space<vmem>>, %arg2: memref<24x128xf32, #tpu.memory_space<vmem>>, %arg3: memref<1x128xf32, #tpu.memory_space<vmem>>, %arg4: memref<128x128xf32, #tpu.memory_space<vmem>>, %arg5: memref<1x128xf32, #tpu.memory_space<vmem>>, %arg6: memref<128x128xf32, #tpu.memory_space<vmem>>, %arg7: memref<1x128xf32, #tpu.memory_space<vmem>>, %arg8: memref<8x6xf32, #tpu.memory_space<vmem>>) attributes {dimension_semantics = [#tpu.dimension_semantics<parallel>], iteration_bounds = array<i64: 1>, scalar_prefetch = 0 : i64, scratch_operands = 0 : i64, tpu.core_type = #tpu.core_type<tc>, window_params = [{transform_indices = @transform_0, window_bounds = array<i64: 8, 24>}, {pipeline_mode = #tpu.pipeline_mode<synchronous>, transform_indices = @transform_1, window_bounds = array<i64: 24, 128>}, {pipeline_mode = #tpu.pipeline_mode<synchronous>, transform_indices = @transform_2, window_bounds = array<i64: 1, 128>}, {pipeline_mode = #tpu.pipeline_mode<synchronous>, transform_indices = @transform_3, window_bounds = array<i64: 128, 128>}, {pipeline_mode = #tpu.pipeline_mode<synchronous>, transform_indices = @transform_4, window_bounds = array<i64: 1, 128>}, {pipeline_mode = #tpu.pipeline_mode<synchronous>, transform_indices = @transform_5, window_bounds = array<i64: 128, 128>}, {pipeline_mode = #tpu.pipeline_mode<synchronous>, transform_indices = @transform_6, window_bounds = array<i64: 1, 128>}, {transform_indices = @transform_7, window_bounds = array<i64: 8, 6>}]} {
    %c0 = arith.constant 0 : index
    %c0_0 = arith.constant 0 : index
    %0 = vector.load %arg1[%c0, %c0_0] : memref<8x24xf32, #tpu.memory_space<vmem>>, vector<8x24xf32>
    %c0_1 = arith.constant 0 : index
    %c0_2 = arith.constant 0 : index
    %1 = vector.load %arg2[%c0_1, %c0_2] : memref<24x128xf32, #tpu.memory_space<vmem>>, vector<24x128xf32>
    %cst = arith.constant dense<0.000000e+00> : vector<8x128xf32>
    %2 = tpu.matmul %0, %1, %cst {dimension_numbers = #tpu.dot_dimension_numbers<[1], [0], [0], [1], [0, 0, 1, 1], [], []>} : vector<8x24xf32>, vector<24x128xf32>, vector<8x128xf32> -> vector<8x128xf32>
    %c0_3 = arith.constant 0 : index
    %c0_4 = arith.constant 0 : index
    %3 = vector.load %arg3[%c0_3, %c0_4] : memref<1x128xf32, #tpu.memory_space<vmem>>, vector<1x128xf32>
    %4 = vector.broadcast %3 : vector<1x128xf32> to vector<8x128xf32>
    %5 = arith.addf %2, %4 : vector<8x128xf32>
    %cst_5 = arith.constant 0.000000e+00 : f32
    %6 = vector.broadcast %cst_5 : f32 to vector<8x128xf32>
    %7 = arith.maximumf %5, %6 : vector<8x128xf32>
    %c0_6 = arith.constant 0 : index
    %c0_7 = arith.constant 0 : index
    %8 = vector.load %arg4[%c0_6, %c0_7] : memref<128x128xf32, #tpu.memory_space<vmem>>, vector<128x128xf32>
    %cst_8 = arith.constant dense<0.000000e+00> : vector<8x128xf32>
    %9 = tpu.matmul %7, %8, %cst_8 {dimension_numbers = #tpu.dot_dimension_numbers<[1], [0], [0], [1], [0, 0, 1, 1], [], []>} : vector<8x128xf32>, vector<128x128xf32>, vector<8x128xf32> -> vector<8x128xf32>
    %c0_9 = arith.constant 0 : index
    %c0_10 = arith.constant 0 : index
    %10 = vector.load %arg5[%c0_9, %c0_10] : memref<1x128xf32, #tpu.memory_space<vmem>>, vector<1x128xf32>
    %11 = vector.broadcast %10 : vector<1x128xf32> to vector<8x128xf32>
    %12 = arith.addf %9, %11 : vector<8x128xf32>
    %cst_11 = arith.constant 0.000000e+00 : f32
    %13 = vector.broadcast %cst_11 : f32 to vector<8x128xf32>
    %14 = arith.maximumf %12, %13 : vector<8x128xf32>
    %c0_12 = arith.constant 0 : index
    %c0_13 = arith.constant 0 : index
    %15 = vector.load %arg6[%c0_12, %c0_13] : memref<128x128xf32, #tpu.memory_space<vmem>>, vector<128x128xf32>
    %cst_14 = arith.constant dense<0.000000e+00> : vector<8x128xf32>
    %16 = tpu.matmul %14, %15, %cst_14 {dimension_numbers = #tpu.dot_dimension_numbers<[1], [0], [0], [1], [0, 0, 1, 1], [], []>} : vector<8x128xf32>, vector<128x128xf32>, vector<8x128xf32> -> vector<8x128xf32>
    %c0_15 = arith.constant 0 : index
    %c0_16 = arith.constant 0 : index
    %17 = vector.load %arg7[%c0_15, %c0_16] : memref<1x128xf32, #tpu.memory_space<vmem>>, vector<1x128xf32>
    %18 = vector.broadcast %17 : vector<1x128xf32> to vector<8x128xf32>
    %19 = arith.addf %16, %18 : vector<8x128xf32>
    %cst_17 = arith.constant dense<0xFF800000> : vector<8xf32>
    %20 = vector.multi_reduction <maximumf>, %19, %cst_17 [1] : vector<8x128xf32> to vector<8xf32>
    %21 = vector.shape_cast %20 : vector<8xf32> to vector<8x1xf32>
    %22 = vector.broadcast %21 : vector<8x1xf32> to vector<8x128xf32>
    %23 = arith.subf %19, %22 : vector<8x128xf32>
    %24 = math.exp %23 : vector<8x128xf32>
    %cst_18 = arith.constant dense<0.000000e+00> : vector<8xf32>
    %25 = vector.multi_reduction <add>, %24, %cst_18 [1] : vector<8x128xf32> to vector<8xf32>
    %26 = vector.shape_cast %25 : vector<8xf32> to vector<8x1xf32>
    %27 = vector.broadcast %26 : vector<8x1xf32> to vector<8x128xf32>
    %28 = arith.divf %24, %27 : vector<8x128xf32>
    %29 = vector.extract_strided_slice %28 {offsets = [0, 0], sizes = [8, 6], strides = [1, 1]} : vector<8x128xf32> to vector<8x6xf32>
    %c0_19 = arith.constant 0 : index
    %c0_20 = arith.constant 0 : index
    %30 = vector.load %arg8[%c0_19, %c0_20] : memref<8x6xf32, #tpu.memory_space<vmem>>, vector<8x6xf32>
    tpu.vector_store %arg8[%c0_19, %c0_20], %29 {strides = array<i32>} : memref<8x6xf32, #tpu.memory_space<vmem>>, vector<8x6xf32>,
    return
  }
  func.func @transform_0(%arg0: i32) -> (i32, i32) {
    %c0_i32 = arith.constant 0 : i32
    %c0_i32_0 = arith.constant 0 : i32
    return %arg0, %c0_i32 : i32, i32
  }
  func.func @transform_1(%arg0: i32) -> (i32, i32) {
    %c0_i32 = arith.constant 0 : i32
    %c0_i32_0 = arith.constant 0 : i32
    %c0_i32_1 = arith.constant 0 : i32
    return %c0_i32, %c0_i32_0 : i32, i32
  }
  func.func @transform_2(%arg0: i32) -> (i32, i32) {
    %c0_i32 = arith.constant 0 : i32
    %c0_i32_0 = arith.constant 0 : i32
    %c0_i32_1 = arith.constant 0 : i32
    return %c0_i32, %c0_i32_0 : i32, i32
  }
  func.func @transform_3(%arg0: i32) -> (i32, i32) {
    %c0_i32 = arith.constant 0 : i32
    %c0_i32_0 = arith.constant 0 : i32
    %c0_i32_1 = arith.constant 0 : i32
    return %c0_i32, %c0_i32_0 : i32, i32
  }
  func.func @transform_4(%arg0: i32) -> (i32, i32) {
    %c0_i32 = arith.constant 0 : i32
    %c0_i32_0 = arith.constant 0 : i32
    %c0_i32_1 = arith.constant 0 : i32
    return %c0_i32, %c0_i32_0 : i32, i32
  }
  func.func @transform_5(%arg0: i32) -> (i32, i32) {
    %c0_i32 = arith.constant 0 : i32
    %c0_i32_0 = arith.constant 0 : i32
    %c0_i32_1 = arith.constant 0 : i32
    return %c0_i32, %c0_i32_0 : i32, i32
  }
  func.func @transform_6(%arg0: i32) -> (i32, i32) {
    %c0_i32 = arith.constant 0 : i32
    %c0_i32_0 = arith.constant 0 : i32
    %c0_i32_1 = arith.constant 0 : i32
    return %c0_i32, %c0_i32_0 : i32, i32
  }
  func.func @transform_7(%arg0: i32) -> (i32, i32) {
    %c0_i32 = arith.constant 0 : i32
    %c0_i32_0 = arith.constant 0 : i32
    return %arg0, %c0_i32 : i32, i32
  }
}

</mosaic_0001>

<llo_original>
// kernel: tpu_custom_call.1
$region0: #{tpu_custom_call.1}
  #allocation0 [shape = 'u32[]', space=smem, size = 0x4, offset = 0x4, fixed_abs, tag = 'smem constant byte address 0x4 - core index']
  #allocation1 [shape = 'u32[144,128]{1,0:T(1,128)}', space=vmem, size = 0x12000, scoped, tag = 'internal scratch']
  %s0 = inlined_call_operand.hbm [shape: f32[8,24], index: 0, kind: input, shape index: {}]
  %s1 = inlined_call_operand.hbm [shape: f32[24,128], index: 1, kind: input, shape index: {}]
  %s2 = inlined_call_operand.hbm [shape: f32[1,128], index: 2, kind: input, shape index: {}]
  %s3 = inlined_call_operand.hbm [shape: f32[128,128], index: 3, kind: input, shape index: {}]
  %s4 = inlined_call_operand.hbm [shape: f32[1,128], index: 4, kind: input, shape index: {}]
  %s5 = inlined_call_operand.hbm [shape: f32[128,128], index: 5, kind: input, shape index: {}]
  %s6 = inlined_call_operand.hbm [shape: f32[1,128], index: 6, kind: input, shape index: {}]
  %s7 = inlined_call_operand.hbm [shape: f32[8,6], index: 7, kind: output, shape index: {}]
  %s8 = sld [smem:[#allocation0]]
  $region66: #{tpu_custom_call.1} parent=0
    _
  %s10 = ssub.s32 1, %s8
  %s11 = scalar_select 0, %s10, %s8
  $region1: #{tpu_custom_call.1} parent=0
    #allocation2 [shape = 'u8[4096]{0}', space=vmem, size = 0x1000, scoped, tag = 'input window, operand 0, single buffered']
    #allocation3 [shape = 's32[1]{0}', space=sflag, size = 0x4, scoped, tag = 'scoped memory for tpu_custom_call.1']
    #allocation4 [shape = 's32[1]{0}', space=sflag, size = 0x4, scoped, tag = 'scoped memory for tpu_custom_call.1']
    #allocation5 [shape = 'u8[12288]{0}', space=vmem, size = 0x3000, scoped, tag = 'input window, operand 1, single buffered']
    #allocation6 [shape = 's32[1]{0}', space=sflag, size = 0x4, scoped, tag = 'scoped memory for tpu_custom_call.1']
    #allocation7 [shape = 'u8[512]{0}', space=vmem, size = 0x400, scoped, tag = 'input window, operand 2, single buffered']
    #allocation8 [shape = 'u8[65536]{0}', space=vmem, size = 0x10000, scoped, tag = 'input window, operand 3, single buffered']
    #allocation9 [shape = 's32[1]{0}', space=sflag, size = 0x4, scoped, tag = 'scoped memory for tpu_custom_call.1']
    #allocation10 [shape = 'u8[512]{0}', space=vmem, size = 0x400, scoped, tag = 'input window, operand 4, single buffered']
    #allocation11 [shape = 'u8[65536]{0}', space=vmem, size = 0x10000, scoped, tag = 'input window, operand 5, single buffered']
    #allocation12 [shape = 's32[1]{0}', space=sflag, size = 0x4, scoped, tag = 'scoped memory for tpu_custom_call.1']
    #allocation13 [shape = 'u8[512]{0}', space=vmem, size = 0x400, scoped, tag = 'input window, operand 6, single buffered']
    #allocation14 [shape = 'u8[4096]{0}', space=vmem, size = 0x1000, scoped, tag = 'output window, operand 0, single buffered']
    %12 = vsyncpa [#allocation3], 0
    %13 = vsyncpa [#allocation6], 0
    %14 = vsyncpa [#allocation9], 0
    %15 = vsyncpa [#allocation12], 0
    %16 = vsyncpa [#allocation4], 0
    // Predicated region
    $region2: #{tpu_custom_call.1} parent=1 // pred_check
      _
    $region3: #{tpu_custom_call.1} parent=1 // pred_check_branch
      %18 = sbr.rel (0) target = $region5
    $region4: #{tpu_custom_call.1} parent=1 // pred_region
      %s20 = ssub.s32 128, 128
      %21 = vsyncadd [#allocation3], %s20
      %s23 = sshll.u32 [#allocation2], 4
      %s24 = int_to_ptr.vmem [resolvable:$true] %s23
      %26 = dma.hbm_to_vmem [thread:$0]  %s0, 128, %s24, [#allocation3]
    $region5: #{tpu_custom_call.1} parent=1 // pred_fallthru
      _
    // Predicated region
    $region6: #{tpu_custom_call.1} parent=1 // pred_check
      _
    $region7: #{tpu_custom_call.1} parent=1 // pred_check_branch
      %28 = sbr.rel (0) target = $region9
    $region8: #{tpu_custom_call.1} parent=1 // pred_region
      %s30 = ssub.s32 384, 384
      %31 = vsyncadd [#allocation6], %s30
      %s32 = sshll.u32 [#allocation5], 4
      %s33 = int_to_ptr.vmem [resolvable:$true] %s32
      %38 = dma.hbm_to_vmem [thread:$0]  %s1, 384, %s33, [#allocation6], 128, 128, 8
    $region9: #{tpu_custom_call.1} parent=1 // pred_fallthru
      _
    // Predicated region
    $region10: #{tpu_custom_call.1} parent=1 // pred_check
      _
    $region11: #{tpu_custom_call.1} parent=1 // pred_check_branch
      %40 = sbr.rel (0) target = $region13
    $region12: #{tpu_custom_call.1} parent=1 // pred_region
      %s42 = ssub.s32 16, 16
      %43 = vsyncadd [#allocation6], %s42
      %s45 = sshll.u32 [#allocation7], 4
      %s46 = int_to_ptr.vmem [resolvable:$true] %s45
      %48 = dma.hbm_to_vmem [thread:$0]  %s2, 16, %s46, [#allocation6]
    $region13: #{tpu_custom_call.1} parent=1 // pred_fallthru
      _
    // Predicated region
    $region14: #{tpu_custom_call.1} parent=1 // pred_check
      _
    $region15: #{tpu_custom_call.1} parent=1 // pred_check_branch
      %50 = sbr.rel (0) target = $region17
    $region16: #{tpu_custom_call.1} parent=1 // pred_region
      %s52 = ssub.s32 2048, 2048
      %53 = vsyncadd [#allocation9], %s52
      %s54 = sshll.u32 [#allocation8], 4
      %s55 = int_to_ptr.vmem [resolvable:$true] %s54
      %60 = dma.hbm_to_vmem [thread:$0]  %s3, 2048, %s55, [#allocation9], 128, 128, 8
    $region17: #{tpu_custom_call.1} parent=1 // pred_fallthru
      _
    // Predicated region
    $region18: #{tpu_custom_call.1} parent=1 // pred_check
      _
    $region19: #{tpu_custom_call.1} parent=1 // pred_check_branch
      %62 = sbr.rel (0) target = $region21
    $region20: #{tpu_custom_call.1} parent=1 // pred_region
      %s64 = ssub.s32 16, 16
      %65 = vsyncadd [#allocation9], %s64
      %s67 = sshll.u32 [#allocation10], 4
      %s68 = int_to_ptr.vmem [resolvable:$true] %s67
      %70 = dma.hbm_to_vmem [thread:$0]  %s4, 16, %s68, [#allocation9]
    $region21: #{tpu_custom_call.1} parent=1 // pred_fallthru
      _
    // Predicated region
    $region22: #{tpu_custom_call.1} parent=1 // pred_check
      _
    $region23: #{tpu_custom_call.1} parent=1 // pred_check_branch
      %72 = sbr.rel (0) target = $region25
    $region24: #{tpu_custom_call.1} parent=1 // pred_region
      %s74 = ssub.s32 2048, 2048
      %75 = vsyncadd [#allocation12], %s74
      %s76 = sshll.u32 [#allocation11], 4
      %s77 = int_to_ptr.vmem [resolvable:$true] %s76
      %82 = dma.hbm_to_vmem [thread:$0]  %s5, 2048, %s77, [#allocation12], 128, 128, 8
    $region25: #{tpu_custom_call.1} parent=1 // pred_fallthru
      _
    // Predicated region
    $region26: #{tpu_custom_call.1} parent=1 // pred_check
      _
    $region27: #{tpu_custom_call.1} parent=1 // pred_check_branch
      %84 = sbr.rel (0) target = $region29
    $region28: #{tpu_custom_call.1} parent=1 // pred_region
      %s86 = ssub.s32 16, 16
      %87 = vsyncadd [#allocation12], %s86
      %s89 = sshll.u32 [#allocation13], 4
      %s90 = int_to_ptr.vmem [resolvable:$true] %s89
      %92 = dma.hbm_to_vmem [thread:$0]  %s6, 16, %s90, [#allocation12]
    $region29: #{tpu_custom_call.1} parent=1 // pred_fallthru
      _
    // Predicated region
    $region30: #{tpu_custom_call.1} parent=1 // pred_check
      _
    $region31: #{tpu_custom_call.1} parent=1 // pred_check_branch
      %94 = sbr.rel (0) target = $region33
    $region32: #{tpu_custom_call.1} parent=1 // pred_region
      %95 = dma.done [#allocation3], 128
    $region33: #{tpu_custom_call.1} parent=1 // pred_fallthru
      _
    // Predicated region
    $region34: #{tpu_custom_call.1} parent=1 // pred_check
      _
    $region35: #{tpu_custom_call.1} parent=1 // pred_check_branch
      %97 = sbr.rel (0) target = $region37
    $region36: #{tpu_custom_call.1} parent=1 // pred_region
      %98 = dma.done [#allocation6], 384
    $region37: #{tpu_custom_call.1} parent=1 // pred_fallthru
      _
    // Predicated region
    $region38: #{tpu_custom_call.1} parent=1 // pred_check
      _
    $region39: #{tpu_custom_call.1} parent=1 // pred_check_branch
      %100 = sbr.rel (0) target = $region41
    $region40: #{tpu_custom_call.1} parent=1 // pred_region
      %101 = dma.done [#allocation6], 16
    $region41: #{tpu_custom_call.1} parent=1 // pred_fallthru
      _
    // Predicated region
    $region42: #{tpu_custom_call.1} parent=1 // pred_check
      _
    $region43: #{tpu_custom_call.1} parent=1 // pred_check_branch
      %103 = sbr.rel (0) target = $region45
    $region44: #{tpu_custom_call.1} parent=1 // pred_region
      %104 = dma.done [#allocation9], 2048
    $region45: #{tpu_custom_call.1} parent=1 // pred_fallthru
      _
    // Predicated region
    $region46: #{tpu_custom_call.1} parent=1 // pred_check
      _
    $region47: #{tpu_custom_call.1} parent=1 // pred_check_branch
      %106 = sbr.rel (0) target = $region49
    $region48: #{tpu_custom_call.1} parent=1 // pred_region
      %107 = dma.done [#allocation9], 16
    $region49: #{tpu_custom_call.1} parent=1 // pred_fallthru
      _
    // Predicated region
    $region50: #{tpu_custom_call.1} parent=1 // pred_check
      _
    $region51: #{tpu_custom_call.1} parent=1 // pred_check_branch
      %109 = sbr.rel (0) target = $region53
    $region52: #{tpu_custom_call.1} parent=1 // pred_region
      %110 = dma.done [#allocation12], 2048
    $region53: #{tpu_custom_call.1} parent=1 // pred_fallthru
      _
    // Predicated region
    $region54: #{tpu_custom_call.1} parent=1 // pred_check
      _
    $region55: #{tpu_custom_call.1} parent=1 // pred_check_branch
      %112 = sbr.rel (0) target = $region57
    $region56: #{tpu_custom_call.1} parent=1 // pred_region
      %113 = dma.done [#allocation12], 16
    $region57: #{tpu_custom_call.1} parent=1 // pred_fallthru
      _
    %v114 = vld [vmem:[#allocation2] sm:$0xff]
    %v115 = vld [vmem:[#allocation5] sm:$0xff]
    %v116 = vld [vmem:[#allocation5 + $0x8] sm:$0xff]
    %v117 = vld [vmem:[#allocation5 + $0x10] sm:$0xff]
    %v118 = vld [vmem:[#allocation7] sm:$0x1]
    %v120 = vlaneseq
    %v121 = vshrl.u32 %v120, 7
    %v122 = vsub.s32 0, %v121
    %v123 = vrot.slane %v118, %v122
    %vm125 = vcmask 195584
    %v127 = vsel %vm125, %v114, 0
    %129 = vmatprep.subr.mxu0 0.0
    %130 = vmatpush1.msra.mxu0 %v115
    %131 = vmatprep.subr.mxu0 0.0
    %132 = vmatpush1.msra.mxu0 %v116
    %133 = vmatprep.subr.mxu0 0.0
    %134 = vmatpush1.msra.mxu0 %v117
    %135 = vmatprep.subr.mxu0 0.0
    %136 = vmatpush1.msra.mxu0 0.0
    %137 = vmatprep.subr.mxu0 0.0
    %138 = vmatpush1.msra.mxu0 0.0
    %139 = vmatprep.subr.mxu0 0.0
    %140 = vmatpush1.msra.mxu0 0.0
    %141 = vmatprep.subr.mxu0 0.0
    %142 = vmatpush1.msra.mxu0 0.0
    %143 = vmatprep.subr.mxu0 0.0
    %144 = vmatpush1.msra.mxu0 0.0
    %145 = vmatprep.subr.mxu0 0.0
    %146 = vmatpush1.msra.mxu0 0.0
    %147 = vmatprep.subr.mxu0 0.0
    %148 = vmatpush1.msra.mxu0 0.0
    %149 = vmatprep.subr.mxu0 0.0
    %150 = vmatpush1.msra.mxu0 0.0
    %151 = vmatprep.subr.mxu0 0.0
    %152 = vmatpush1.msra.mxu0 0.0
    %153 = vmatprep.subr.mxu0 0.0
    %154 = vmatpush1.msra.mxu0 0.0
    %155 = vmatprep.subr.mxu0 0.0
    %156 = vmatpush1.msra.mxu0 0.0
    %157 = vmatprep.subr.mxu0 0.0
    %158 = vmatpush1.msra.mxu0 0.0
    %159 = vmatprep.subr.mxu0 0.0
    %160 = vmatpush1.msra.mxu0 0.0
    %161 = vmatprep.subr.mxu0 0.0
    %162 = vmatpush1.msra.mxu0 0.0
    %163 = vmatprep.subr.mxu0 0.0
    %164 = vmatpush1.msra.mxu0 0.0
    %165 = vmatprep.subr.mxu0 0.0
    %166 = vmatpush1.msra.mxu0 0.0
    %167 = vmatprep.subr.mxu0 0.0
    %168 = vmatpush1.msra.mxu0 0.0
    %169 = vmatprep.subr.mxu0 0.0
    %170 = vmatpush1.msra.mxu0 0.0
    %171 = vmatprep.subr.mxu0 0.0
    %172 = vmatpush1.msra.mxu0 0.0
    %173 = vmatprep.subr.mxu0 0.0
    %174 = vmatpush1.msra.mxu0 0.0
    %175 = vmatprep.subr.mxu0 0.0
    %176 = vmatpush1.msra.mxu0 0.0
    %177 = vmatprep.subr.mxu0 0.0
    %178 = vmatpush1.msra.mxu0 0.0
    %179 = vmatprep.subr.mxu0 0.0
    %180 = vmatpush1.msra.mxu0 0.0
    %181 = vmatprep.subr.mxu0 0.0
    %182 = vmatpush1.msra.mxu0 0.0
    %183 = vmatprep.subr.mxu0 0.0
    %184 = vmatpush1.msra.mxu0 0.0
    %185 = vmatprep.subr.mxu0 0.0
    %186 = vmatpush1.msra.mxu0 0.0
    %187 = vmatprep.subr.mxu0 0.0
    %188 = vmatpush1.msra.mxu0 0.0
    %189 = vmatprep.subr.mxu0 0.0
    %190 = vmatpush1.msra.mxu0 0.0
    %191 = vmatprep.subr.mxu0 0.0
    %192 = vmatpush1.msra.mxu0 0.0
    %193 = vmatprep.mubr.f32.mxu0 0.0
    %194 = vmatmul.mubr.f32.gmra.mrb[0].mxu0 %v127
    %v195 = vpop.f32.mrb[0].mxu0
    %v196 = vadd.f32 %v123, %v195
    %v197 = vpop.f32.mrb[0].mxu0
    %198 = vdwg.mxu0
    %v199 = vmax.f32 %v196, 0.0
    %v200 = vld [vmem:[#allocation8] sm:$0xff]
    %v201 = vld [vmem:[#allocation8 + $0x8] sm:$0xff]
    %v202 = vld [vmem:[#allocation8 + $0x10] sm:$0xff]
    %v203 = vld [vmem:[#allocation8 + $0x18] sm:$0xff]
    %v204 = vld [vmem:[#allocation8 + $0x20] sm:$0xff]
    %v205 = vld [vmem:[#allocation8 + $0x28] sm:$0xff]
    %v206 = vld [vmem:[#allocation8 + $0x30] sm:$0xff]
    %v207 = vld [vmem:[#allocation8 + $0x38] sm:$0xff]
    %v208 = vld [vmem:[#allocation8 + $0x40] sm:$0xff]
    %v209 = vld [vmem:[#allocation8 + $0x48] sm:$0xff]
    %v210 = vld [vmem:[#allocation8 + $0x50] sm:$0xff]
    %v211 = vld [vmem:[#allocation8 + $0x58] sm:$0xff]
    %v212 = vld [vmem:[#allocation8 + $0x60] sm:$0xff]
    %v213 = vld [vmem:[#allocation8 + $0x68] sm:$0xff]
    %v214 = vld [vmem:[#allocation8 + $0x70] sm:$0xff]
    %v215 = vld [vmem:[#allocation8 + $0x78] sm:$0xff]
    %v216 = vld [vmem:[#allocation10] sm:$0x1]
    %v218 = vlaneseq
    %v219 = vshrl.u32 %v218, 7
    %v220 = vsub.s32 0, %v219
    %v221 = vrot.slane %v216, %v220
    %223 = vmatprep.subr.mxu0 0.0
    %224 = vmatpush1.msra.mxu0 %v200
    %225 = vmatprep.subr.mxu0 0.0
    %226 = vmatpush1.msra.mxu0 %v201
    %227 = vmatprep.subr.mxu0 0.0
    %228 = vmatpush1.msra.mxu0 %v202
    %229 = vmatprep.subr.mxu0 0.0
    %230 = vmatpush1.msra.mxu0 %v203
    %231 = vmatprep.subr.mxu0 0.0
    %232 = vmatpush1.msra.mxu0 %v204
    %233 = vmatprep.subr.mxu0 0.0
    %234 = vmatpush1.msra.mxu0 %v205
    %235 = vmatprep.subr.mxu0 0.0
    %236 = vmatpush1.msra.mxu0 %v206
    %237 = vmatprep.subr.mxu0 0.0
    %238 = vmatpush1.msra.mxu0 %v207
    %239 = vmatprep.subr.mxu0 0.0
    %240 = vmatpush1.msra.mxu0 %v208
    %241 = vmatprep.subr.mxu0 0.0
    %242 = vmatpush1.msra.mxu0 %v209
    %243 = vmatprep.subr.mxu0 0.0
    %244 = vmatpush1.msra.mxu0 %v210
    %245 = vmatprep.subr.mxu0 0.0
    %246 = vmatpush1.msra.mxu0 %v211
    %247 = vmatprep.subr.mxu0 0.0
    %248 = vmatpush1.msra.mxu0 %v212
    %249 = vmatprep.subr.mxu0 0.0
    %250 = vmatpush1.msra.mxu0 %v213
    %251 = vmatprep.subr.mxu0 0.0
    %252 = vmatpush1.msra.mxu0 %v214
    %253 = vmatprep.subr.mxu0 0.0
    %254 = vmatpush1.msra.mxu0 %v215
    %255 = vmatprep.subr.mxu0 0.0
    %256 = vmatpush1.msra.mxu0 0.0
    %257 = vmatprep.subr.mxu0 0.0
    %258 = vmatpush1.msra.mxu0 0.0
    %259 = vmatprep.subr.mxu0 0.0
    %260 = vmatpush1.msra.mxu0 0.0
    %261 = vmatprep.subr.mxu0 0.0
    %262 = vmatpush1.msra.mxu0 0.0
    %263 = vmatprep.subr.mxu0 0.0
    %264 = vmatpush1.msra.mxu0 0.0
    %265 = vmatprep.subr.mxu0 0.0
    %266 = vmatpush1.msra.mxu0 0.0
    %267 = vmatprep.subr.mxu0 0.0
    %268 = vmatpush1.msra.mxu0 0.0
    %269 = vmatprep.subr.mxu0 0.0
    %270 = vmatpush1.msra.mxu0 0.0
    %271 = vmatprep.subr.mxu0 0.0
    %272 = vmatpush1.msra.mxu0 0.0
    %273 = vmatprep.subr.mxu0 0.0
    %274 = vmatpush1.msra.mxu0 0.0
    %275 = vmatprep.subr.mxu0 0.0
    %276 = vmatpush1.msra.mxu0 0.0
    %277 = vmatprep.subr.mxu0 0.0
    %278 = vmatpush1.msra.mxu0 0.0
    %279 = vmatprep.subr.mxu0 0.0
    %280 = vmatpush1.msra.mxu0 0.0
    %281 = vmatprep.subr.mxu0 0.0
    %282 = vmatpush1.msra.mxu0 0.0
    %283 = vmatprep.subr.mxu0 0.0
    %284 = vmatpush1.msra.mxu0 0.0
    %285 = vmatprep.subr.mxu0 0.0
    %286 = vmatpush1.msra.mxu0 0.0
    %287 = vmatprep.mubr.f32.mxu0 0.0
    %288 = vmatmul.mubr.f32.gmra.mrb[0].mxu0 %v199
    %v289 = vpop.f32.mrb[0].mxu0
    %v290 = vadd.f32 %v221, %v289
    %v291 = vpop.f32.mrb[0].mxu0
    %292 = vdwg.mxu0
    %v293 = vmax.f32 %v290, 0.0
    %v294 = vld [vmem:[#allocation11] sm:$0xff]
    %v295 = vld [vmem:[#allocation11 + $0x8] sm:$0xff]
    %v296 = vld [vmem:[#allocation11 + $0x10] sm:$0xff]
    %v297 = vld [vmem:[#allocation11 + $0x18] sm:$0xff]
    %v298 = vld [vmem:[#allocation11 + $0x20] sm:$0xff]
    %v299 = vld [vmem:[#allocation11 + $0x28] sm:$0xff]
    %v300 = vld [vmem:[#allocation11 + $0x30] sm:$0xff]
    %v301 = vld [vmem:[#allocation11 + $0x38] sm:$0xff]
    %v302 = vld [vmem:[#allocation11 + $0x40] sm:$0xff]
    %v303 = vld [vmem:[#allocation11 + $0x48] sm:$0xff]
    %v304 = vld [vmem:[#allocation11 + $0x50] sm:$0xff]
    %v305 = vld [vmem:[#allocation11 + $0x58] sm:$0xff]
    %v306 = vld [vmem:[#allocation11 + $0x60] sm:$0xff]
    %v307 = vld [vmem:[#allocation11 + $0x68] sm:$0xff]
    %v308 = vld [vmem:[#allocation11 + $0x70] sm:$0xff]
    %v309 = vld [vmem:[#allocation11 + $0x78] sm:$0xff]
    %v310 = vld [vmem:[#allocation13] sm:$0x1]
    %v312 = vlaneseq
    %v313 = vshrl.u32 %v312, 7
    %v314 = vsub.s32 0, %v313
    %v315 = vrot.slane %v310, %v314
    %317 = vmatprep.subr.mxu0 0.0
    %318 = vmatpush1.msra.mxu0 %v294
    %319 = vmatprep.subr.mxu0 0.0
    %320 = vmatpush1.msra.mxu0 %v295
    %321 = vmatprep.subr.mxu0 0.0
    %322 = vmatpush1.msra.mxu0 %v296
    %323 = vmatprep.subr.mxu0 0.0
    %324 = vmatpush1.msra.mxu0 %v297
    %325 = vmatprep.subr.mxu0 0.0
    %326 = vmatpush1.msra.mxu0 %v298
    %327 = vmatprep.subr.mxu0 0.0
    %328 = vmatpush1.msra.mxu0 %v299
    %329 = vmatprep.subr.mxu0 0.0
    %330 = vmatpush1.msra.mxu0 %v300
    %331 = vmatprep.subr.mxu0 0.0
    %332 = vmatpush1.msra.mxu0 %v301
    %333 = vmatprep.subr.mxu0 0.0
    %334 = vmatpush1.msra.mxu0 %v302
    %335 = vmatprep.subr.mxu0 0.0
    %336 = vmatpush1.msra.mxu0 %v303
    %337 = vmatprep.subr.mxu0 0.0
    %338 = vmatpush1.msra.mxu0 %v304
    %339 = vmatprep.subr.mxu0 0.0
    %340 = vmatpush1.msra.mxu0 %v305
    %341 = vmatprep.subr.mxu0 0.0
    %342 = vmatpush1.msra.mxu0 %v306
    %343 = vmatprep.subr.mxu0 0.0
    %344 = vmatpush1.msra.mxu0 %v307
    %345 = vmatprep.subr.mxu0 0.0
    %346 = vmatpush1.msra.mxu0 %v308
    %347 = vmatprep.subr.mxu0 0.0
    %348 = vmatpush1.msra.mxu0 %v309
    %349 = vmatprep.subr.mxu0 0.0
    %350 = vmatpush1.msra.mxu0 0.0
    %351 = vmatprep.subr.mxu0 0.0
    %352 = vmatpush1.msra.mxu0 0.0
    %353 = vmatprep.subr.mxu0 0.0
    %354 = vmatpush1.msra.mxu0 0.0
    %355 = vmatprep.subr.mxu0 0.0
    %356 = vmatpush1.msra.mxu0 0.0
    %357 = vmatprep.subr.mxu0 0.0
    %358 = vmatpush1.msra.mxu0 0.0
    %359 = vmatprep.subr.mxu0 0.0
    %360 = vmatpush1.msra.mxu0 0.0
    %361 = vmatprep.subr.mxu0 0.0
    %362 = vmatpush1.msra.mxu0 0.0
    %363 = vmatprep.subr.mxu0 0.0
    %364 = vmatpush1.msra.mxu0 0.0
    %365 = vmatprep.subr.mxu0 0.0
    %366 = vmatpush1.msra.mxu0 0.0
    %367 = vmatprep.subr.mxu0 0.0
    %368 = vmatpush1.msra.mxu0 0.0
    %369 = vmatprep.subr.mxu0 0.0
    %370 = vmatpush1.msra.mxu0 0.0
    %371 = vmatprep.subr.mxu0 0.0
    %372 = vmatpush1.msra.mxu0 0.0
    %373 = vmatprep.subr.mxu0 0.0
    %374 = vmatpush1.msra.mxu0 0.0
    %375 = vmatprep.subr.mxu0 0.0
    %376 = vmatpush1.msra.mxu0 0.0
    %377 = vmatprep.subr.mxu0 0.0
    %378 = vmatpush1.msra.mxu0 0.0
    %379 = vmatprep.subr.mxu0 0.0
    %380 = vmatpush1.msra.mxu0 0.0
    %381 = vmatprep.mubr.f32.mxu0 0.0
    %382 = vmatmul.mubr.f32.gmra.mrb[0].mxu0 %v293
    %v383 = vpop.f32.mrb[0].mxu0
    %v384 = vadd.f32 %v315, %v383
    %v385 = vpop.f32.mrb[0].mxu0
    %386 = vdwg.mxu0
    %387 = vmax.xlane.f32.xlu0 %v384
    %v388 = vpop.xlane.xlu0 %387
    %v389 = vsub.f32 %v384, %v388
    %v390 = vmul.f32 %v389, 1.442695
    %v391 = vpow.pop %v390
    %392 = vadd.xlane.f32.xlu0 %v391
    %v393 = vpop.xlane.xlu0 %392
    %v394 = vrcp.pop %v393
    %v395 = vmul.f32 %v391, %v394
    %vm396 = vcmask 48128
    %397 = vst.msk [vmem:[#allocation14] sm:$0xff] %vm396, %v395
    // Predicated region
    $region58: #{tpu_custom_call.1} parent=1 // pred_check
      _
    $region59: #{tpu_custom_call.1} parent=1 // pred_check_branch
      %399 = sbr.rel (0) target = $region61
    $region60: #{tpu_custom_call.1} parent=1 // pred_region
      %s401 = ssub.s32 128, 128
      %402 = vsyncadd [#allocation4], %s401
      %s404 = sshll.u32 [#allocation14], 4
      %s405 = int_to_ptr.vmem [resolvable:$true] %s404
      %407 = dma.vmem_to_hbm [thread:$0]  %s405, 128, %s7, [#allocation4]
    $region61: #{tpu_custom_call.1} parent=1 // pred_fallthru
      _
    // Predicated region
    $region62: #{tpu_custom_call.1} parent=1 // pred_check
      _
    $region63: #{tpu_custom_call.1} parent=1 // pred_check_branch
      %409 = sbr.rel (0) target = $region65
    $region64: #{tpu_custom_call.1} parent=1 // pred_region
      %410 = dma.done [#allocation4], 128
    $region65: #{tpu_custom_call.1} parent=1 // pred_fallthru
      _
    %411 = vsyncpa [#allocation3], 1
    %412 = vsyncpa [#allocation6], 1
    %413 = vsyncpa [#allocation9], 1
    %414 = vsyncpa [#allocation12], 1
    %415 = vsyncpa [#allocation4], 1

</llo_original>
